<compile_context>
chip_gen: v7x
topology: tpu7x:2x2x1
jax: 0.10.0
libtpu: 0.0.40
codegen_flags: <defaults>
</compile_context>

<pallas_src>
import functools

import jax
import jax.numpy as jnp
from jax.experimental import pallas as pl
from jax.experimental.pallas import tpu as pltpu

D_IN, H1, H2, H3, D_OUT = 1, 256, 512, 256, 2


def _round_up(n, m):
    return ((n + m - 1) // m) * m


def mlp_kernel(x_ref,
               w1_ref, b1_ref,
               w2_ref, b2_ref,
               w3_ref, b3_ref,
               w4_ref, b4_ref,
               out_ref,
               *, compute_dtype):
    x = x_ref[...]                                                   # [TB, 1] f32

    # linear1 + (dropout = identity) + relu
    # K=1 contraction -> broadcast outer product on the VPU (no MXU round-trip).
    h = jnp.maximum(x * w1_ref[...] + b1_ref[...], 0.0)             # [TB, 256] f32

    # linear2 + (dropout = identity) + relu
    # Weights arrive pre-cast to compute_dtype; only the activation is cast here.
    h = jnp.dot(h.astype(compute_dtype), w2_ref[...],
                preferred_element_type=jnp.float32) + b2_ref[...]
    h = jnp.maximum(h, 0.0)                                          # [TB, 512] f32

    # linear3 + (dropout = identity) + relu
    h = jnp.dot(h.astype(compute_dtype), w3_ref[...],
                preferred_element_type=jnp.float32) + b3_ref[...]
    h = jnp.maximum(h, 0.0)                                          # [TB, 256] f32

    # linear4 (no activation)
    out = jnp.dot(h.astype(compute_dtype), w4_ref[...],
                  preferred_element_type=jnp.float32) + b4_ref[...]  # [TB, 2] f32

    out_ref[...] = out.astype(out_ref.dtype)                         # one lane-contiguous store


def shallow_linear_forward(x, params, *, tile_b=1024, compute_dtype=jnp.bfloat16):
    """x: [B, 1]. params: dict of pre-transposed weights / biases (f32).

    Returns (out[:, 0:1], out[:, 1:2]) like the PyTorch module.
    Any batch size B is accepted (padded internally to a multiple of the tile).
    compute_dtype: dtype fed to the MXU matmuls (accumulation is always f32).
      jnp.bfloat16 (default) = fast path; jnp.float32 = exact parity with the
      f32 reference.
    """
    B = x.shape[0]
    x = x.astype(jnp.float32)

    # ---- batch tiling ------------------------------------------------------
    B8 = _round_up(max(B, 1), 8)
    tile = min(_round_up(tile_b, 8), B8)
    n_steps = pl.cdiv(B8, tile)
    # v7x has 2 TensorCores and the "parallel" grid axis is how work reaches
    # the second core: if everything fits in one tile but the batch is big
    # enough (>= 2*256 rows), split into two balanced tiles instead.
    if n_steps == 1 and B8 >= 512:
        n_steps = 2
    tile = _round_up(pl.cdiv(B8, n_steps), 8)
    B_pad = n_steps * tile
    if B_pad != B:
        x = jnp.pad(x, ((0, B_pad - B), (0, 0)))
    grid = (n_steps,)

    # ---- parameter prep ----------------------------------------------------
    # Pre-cast the big matmul weights to compute_dtype in the wrapper (not per
    # grid step inside the kernel); halves their HBM DMA + VMEM when bf16.
    mm_dtype = jnp.dtype(compute_dtype)
    w1, b1 = params["w1"], params["b1"]
    w2 = params["w2"].astype(mm_dtype)
    w3 = params["w3"].astype(mm_dtype)
    w4 = params["w4"].astype(mm_dtype)
    b2, b3, b4 = params["b2"], params["b3"], params["b4"]

    # Weights/biases: constant index_map (VMEM-resident, never re-DMA'd) and
    # single-buffered (no pointless second pipeline buffer).
    def resident(shape):
        return pl.BlockSpec(shape, lambda i: (0, 0), pipeline_mode=pl.Buffered(1))

    wbytes = mm_dtype.itemsize
    flops = 2 * B_pad * (D_IN * H1 + H1 * H2 + H2 * H3 + H3 * D_OUT)
    param_bytes = (4 * (D_IN * H1 + H1 + H2 + H3 + D_OUT)            # w1 + biases (f32)
                   + wbytes * (H1 * H2 + H2 * H3 + H3 * D_OUT))      # w2/w3/w4 (compute dtype)
    bytes_accessed = param_bytes + 4 * B_pad * (D_IN + D_OUT)

    out = pl.pallas_call(
        functools.partial(mlp_kernel, compute_dtype=mm_dtype),
        out_shape=jax.ShapeDtypeStruct((B_pad, D_OUT), jnp.float32),
        grid_spec=pltpu.PrefetchScalarGridSpec(
            num_scalar_prefetch=0,
            grid=grid,
            in_specs=[
                pl.BlockSpec((tile, D_IN), lambda i: (i, 0)),        # x tile
                resident((D_IN, H1)),  resident((1, H1)),            # W1, b1
                resident((H1, H2)),    resident((1, H2)),            # W2, b2
                resident((H2, H3)),    resident((1, H3)),            # W3, b3
                resident((H3, D_OUT)), resident((1, D_OUT)),         # W4, b4
            ],
            out_specs=pl.BlockSpec((tile, D_OUT), lambda i: (i, 0)),
        ),
        compiler_params=pltpu.CompilerParams(
            dimension_semantics=("parallel",),
            # v5e's default scoped VMEM is only 16 MiB; big batch tiles need
            # more.  48 MiB is safe on v5e/v6e (128 MiB phys) and v7x (64 MiB).
            vmem_limit_bytes=48 * 1024 * 1024,
        ),
        cost_estimate=pl.CostEstimate(
            flops=flops, transcendentals=0, bytes_accessed=bytes_accessed),
    )(x,
      w1, b1, w2, b2, w3, b3, w4, b4)

    out = out[:B]
    return out[:, 0:1], out[:, 1:2]


def init_params(key):
    """Deterministic init mimicking PyTorch nn.Linear default
    (U[-1/sqrt(fan_in), +1/sqrt(fan_in)]). Weights stored pre-transposed as [in, out]."""
    def linear(k, fan_in, fan_out):
        kw, kb = jax.random.split(k)
        bound = 1.0 / jnp.sqrt(float(fan_in))
        w = jax.random.uniform(kw, (fan_in, fan_out), jnp.float32, -bound, bound)
        b = jax.random.uniform(kb, (1, fan_out), jnp.float32, -bound, bound)
        return w, b

    k1, k2, k3, k4 = jax.random.split(key, 4)
    w1, b1 = linear(k1, D_IN, H1)
    w2, b2 = linear(k2, H1, H2)
    w3, b3 = linear(k3, H2, H3)
    w4, b4 = linear(k4, H3, D_OUT)
    return {"w1": w1, "b1": b1, "w2": w2, "b2": b2,
            "w3": w3, "b3": b3, "w4": w4, "b4": b4}


def reference_forward(x, p):
    h = jnp.maximum(x @ p["w1"] + p["b1"], 0.0)
    h = jnp.maximum(h @ p["w2"] + p["b2"], 0.0)
    h = jnp.maximum(h @ p["w3"] + p["b3"], 0.0)
    out = h @ p["w4"] + p["b4"]
    return out[:, 0:1], out[:, 1:2]


if __name__ == "__main__":
    key = jax.random.PRNGKey(0)
    k_param, k_x1, k_x2 = jax.random.split(key, 3)

    params = init_params(k_param)

    # 1) Exact-parity path (f32 MXU inputs), small non-multiple-of-8 batch:
    #    exercises padding + the single-tile grid.
    B_small = 13
    x_small = jax.random.normal(k_x1, (B_small, D_IN), jnp.float32)
    out0, out1 = shallow_linear_forward(x_small, params, compute_dtype=jnp.float32)
    jax.block_until_ready((out0, out1))
    r0, r1 = reference_forward(x_small, params)
    assert out0.shape == (B_small, 1) and out1.shape == (B_small, 1)
    assert jnp.allclose(out0, r0, atol=1e-4, rtol=1e-4)
    assert jnp.allclose(out1, r1, atol=1e-4, rtol=1e-4)

    # 2) Default fast path (bf16 MXU inputs, f32 accumulation), larger batch:
    #    splits into two 512-row tiles -> both v7x TensorCores stay busy.
    B_big = 1024
    x_big = jax.random.normal(k_x2, (B_big, D_IN), jnp.float32)
    o0b, o1b = shallow_linear_forward(x_big, params)           # bf16 default
    jax.block_until_ready((o0b, o1b))
    rb0, rb1 = reference_forward(x_big, params)
    assert o0b.shape == (B_big, 1) and o1b.shape == (B_big, 1)
    # bf16 matmul inputs -> loosened tolerance vs. the f32 reference.
    assert jnp.allclose(o0b, rb0, atol=5e-2, rtol=5e-2)
    assert jnp.allclose(o1b, rb1, atol=5e-2, rtol=5e-2)

    print("KERNEL_OK")
</pallas_src>

<mosaic_0001>
module attributes {stable_mosaic.version = 11 : i64} {
  func.func @mlp_kernel(%arg0: i32, %arg1: memref<16x1xf32, #tpu.memory_space<vmem>>, %arg2: memref<1x256xf32, #tpu.memory_space<vmem>>, %arg3: memref<1x256xf32, #tpu.memory_space<vmem>>, %arg4: memref<256x512xf32, #tpu.memory_space<vmem>>, %arg5: memref<1x512xf32, #tpu.memory_space<vmem>>, %arg6: memref<512x256xf32, #tpu.memory_space<vmem>>, %arg7: memref<1x256xf32, #tpu.memory_space<vmem>>, %arg8: memref<256x2xf32, #tpu.memory_space<vmem>>, %arg9: memref<1x2xf32, #tpu.memory_space<vmem>>, %arg10: memref<16x2xf32, #tpu.memory_space<vmem>>) attributes {dimension_semantics = [#tpu.dimension_semantics<parallel>], iteration_bounds = array<i64: 1>, scalar_prefetch = 0 : i64, scratch_operands = 0 : i64, tpu.core_type = #tpu.core_type<tc>, window_params = [{transform_indices = @transform_0, window_bounds = array<i64: 16, 1>}, {pipeline_mode = #tpu.pipeline_mode<synchronous>, transform_indices = @transform_1, window_bounds = array<i64: 1, 256>}, {pipeline_mode = #tpu.pipeline_mode<synchronous>, transform_indices = @transform_2, window_bounds = array<i64: 1, 256>}, {pipeline_mode = #tpu.pipeline_mode<synchronous>, transform_indices = @transform_3, window_bounds = array<i64: 256, 512>}, {pipeline_mode = #tpu.pipeline_mode<synchronous>, transform_indices = @transform_4, window_bounds = array<i64: 1, 512>}, {pipeline_mode = #tpu.pipeline_mode<synchronous>, transform_indices = @transform_5, window_bounds = array<i64: 512, 256>}, {pipeline_mode = #tpu.pipeline_mode<synchronous>, transform_indices = @transform_6, window_bounds = array<i64: 1, 256>}, {pipeline_mode = #tpu.pipeline_mode<synchronous>, transform_indices = @transform_7, window_bounds = array<i64: 256, 2>}, {pipeline_mode = #tpu.pipeline_mode<synchronous>, transform_indices = @transform_8, window_bounds = array<i64: 1, 2>}, {transform_indices = @transform_9, window_bounds = array<i64: 16, 2>}]} {
    %c0 = arith.constant 0 : index
    %c0_0 = arith.constant 0 : index
    %0 = vector.load %arg1[%c0, %c0_0] : memref<16x1xf32, #tpu.memory_space<vmem>>, vector<16x1xf32>
    %c0_1 = arith.constant 0 : index
    %c0_2 = arith.constant 0 : index
    %1 = vector.load %arg2[%c0_1, %c0_2] : memref<1x256xf32, #tpu.memory_space<vmem>>, vector<1x256xf32>
    %2 = vector.broadcast %0 : vector<16x1xf32> to vector<16x256xf32>
    %3 = vector.broadcast %1 : vector<1x256xf32> to vector<16x256xf32>
    %4 = arith.mulf %2, %3 : vector<16x256xf32>
    %c0_3 = arith.constant 0 : index
    %c0_4 = arith.constant 0 : index
    %5 = vector.load %arg3[%c0_3, %c0_4] : memref<1x256xf32, #tpu.memory_space<vmem>>, vector<1x256xf32>
    %6 = vector.broadcast %5 : vector<1x256xf32> to vector<16x256xf32>
    %7 = arith.addf %4, %6 : vector<16x256xf32>
    %cst = arith.constant 0.000000e+00 : f32
    %8 = vector.broadcast %cst : f32 to vector<16x256xf32>
    %9 = arith.maximumf %7, %8 : vector<16x256xf32>
    %c0_5 = arith.constant 0 : index
    %c0_6 = arith.constant 0 : index
    %10 = vector.load %arg4[%c0_5, %c0_6] : memref<256x512xf32, #tpu.memory_space<vmem>>, vector<256x512xf32>
    %cst_7 = arith.constant dense<0.000000e+00> : vector<16x512xf32>
    %11 = tpu.matmul %9, %10, %cst_7 {dimension_numbers = #tpu.dot_dimension_numbers<[1], [0], [0], [1], [0, 0, 1, 1], [], []>} : vector<16x256xf32>, vector<256x512xf32>, vector<16x512xf32> -> vector<16x512xf32>
    %c0_8 = arith.constant 0 : index
    %c0_9 = arith.constant 0 : index
    %12 = vector.load %arg5[%c0_8, %c0_9] : memref<1x512xf32, #tpu.memory_space<vmem>>, vector<1x512xf32>
    %13 = vector.broadcast %12 : vector<1x512xf32> to vector<16x512xf32>
    %14 = arith.addf %11, %13 : vector<16x512xf32>
    %cst_10 = arith.constant 0.000000e+00 : f32
    %15 = vector.broadcast %cst_10 : f32 to vector<16x512xf32>
    %16 = arith.maximumf %14, %15 : vector<16x512xf32>
    %c0_11 = arith.constant 0 : index
    %c0_12 = arith.constant 0 : index
    %17 = vector.load %arg6[%c0_11, %c0_12] : memref<512x256xf32, #tpu.memory_space<vmem>>, vector<512x256xf32>
    %cst_13 = arith.constant dense<0.000000e+00> : vector<16x256xf32>
    %18 = tpu.matmul %16, %17, %cst_13 {dimension_numbers = #tpu.dot_dimension_numbers<[1], [0], [0], [1], [0, 0, 1, 1], [], []>} : vector<16x512xf32>, vector<512x256xf32>, vector<16x256xf32> -> vector<16x256xf32>
    %c0_14 = arith.constant 0 : index
    %c0_15 = arith.constant 0 : index
    %19 = vector.load %arg7[%c0_14, %c0_15] : memref<1x256xf32, #tpu.memory_space<vmem>>, vector<1x256xf32>
    %20 = vector.broadcast %19 : vector<1x256xf32> to vector<16x256xf32>
    %21 = arith.addf %18, %20 : vector<16x256xf32>
    %cst_16 = arith.constant 0.000000e+00 : f32
    %22 = vector.broadcast %cst_16 : f32 to vector<16x256xf32>
    %23 = arith.maximumf %21, %22 : vector<16x256xf32>
    %c0_17 = arith.constant 0 : index
    %c0_18 = arith.constant 0 : index
    %24 = vector.load %arg8[%c0_17, %c0_18] : memref<256x2xf32, #tpu.memory_space<vmem>>, vector<256x2xf32>
    %cst_19 = arith.constant dense<0.000000e+00> : vector<16x2xf32>
    %25 = tpu.matmul %23, %24, %cst_19 {dimension_numbers = #tpu.dot_dimension_numbers<[1], [0], [0], [1], [0, 0, 1, 1], [], []>} : vector<16x256xf32>, vector<256x2xf32>, vector<16x2xf32> -> vector<16x2xf32>
    %c0_20 = arith.constant 0 : index
    %c0_21 = arith.constant 0 : index
    %26 = vector.load %arg9[%c0_20, %c0_21] : memref<1x2xf32, #tpu.memory_space<vmem>>, vector<1x2xf32>
    %27 = vector.broadcast %26 : vector<1x2xf32> to vector<16x2xf32>
    %28 = arith.addf %25, %27 : vector<16x2xf32>
    %c0_22 = arith.constant 0 : index
    %c0_23 = arith.constant 0 : index
    %29 = vector.load %arg10[%c0_22, %c0_23] : memref<16x2xf32, #tpu.memory_space<vmem>>, vector<16x2xf32>
    tpu.vector_store %arg10[%c0_22, %c0_23], %28 {strides = array<i32>} : memref<16x2xf32, #tpu.memory_space<vmem>>, vector<16x2xf32>,
    return
  }
  func.func @transform_0(%arg0: i32) -> (i32, i32) {
    %c0_i32 = arith.constant 0 : i32
    %c0_i32_0 = arith.constant 0 : i32
    return %arg0, %c0_i32 : i32, i32
  }
  func.func @transform_1(%arg0: i32) -> (i32, i32) {
    %c0_i32 = arith.constant 0 : i32
    %c0_i32_0 = arith.constant 0 : i32
    %c0_i32_1 = arith.constant 0 : i32
    return %c0_i32, %c0_i32_0 : i32, i32
  }
  func.func @transform_2(%arg0: i32) -> (i32, i32) {
    %c0_i32 = arith.constant 0 : i32
    %c0_i32_0 = arith.constant 0 : i32
    %c0_i32_1 = arith.constant 0 : i32
    return %c0_i32, %c0_i32_0 : i32, i32
  }
  func.func @transform_3(%arg0: i32) -> (i32, i32) {
    %c0_i32 = arith.constant 0 : i32
    %c0_i32_0 = arith.constant 0 : i32
    %c0_i32_1 = arith.constant 0 : i32
    return %c0_i32, %c0_i32_0 : i32, i32
  }
  func.func @transform_4(%arg0: i32) -> (i32, i32) {
    %c0_i32 = arith.constant 0 : i32
    %c0_i32_0 = arith.constant 0 : i32
    %c0_i32_1 = arith.constant 0 : i32
    return %c0_i32, %c0_i32_0 : i32, i32
  }
  func.func @transform_5(%arg0: i32) -> (i32, i32) {
    %c0_i32 = arith.constant 0 : i32
    %c0_i32_0 = arith.constant 0 : i32
    %c0_i32_1 = arith.constant 0 : i32
    return %c0_i32, %c0_i32_0 : i32, i32
  }
  func.func @transform_6(%arg0: i32) -> (i32, i32) {
    %c0_i32 = arith.constant 0 : i32
    %c0_i32_0 = arith.constant 0 : i32
    %c0_i32_1 = arith.constant 0 : i32
    return %c0_i32, %c0_i32_0 : i32, i32
  }
  func.func @transform_7(%arg0: i32) -> (i32, i32) {
    %c0_i32 = arith.constant 0 : i32
    %c0_i32_0 = arith.constant 0 : i32
    %c0_i32_1 = arith.constant 0 : i32
    return %c0_i32, %c0_i32_0 : i32, i32
  }
  func.func @transform_8(%arg0: i32) -> (i32, i32) {
    %c0_i32 = arith.constant 0 : i32
    %c0_i32_0 = arith.constant 0 : i32
    %c0_i32_1 = arith.constant 0 : i32
    return %c0_i32, %c0_i32_0 : i32, i32
  }
  func.func @transform_9(%arg0: i32) -> (i32, i32) {
    %c0_i32 = arith.constant 0 : i32
    %c0_i32_0 = arith.constant 0 : i32
    return %arg0, %c0_i32 : i32, i32
  }
}

</mosaic_0001>

<llo_original>
// kernel: tpu_custom_call.1
$region0: #{tpu_custom_call.1}
  #allocation0 [shape = 'u32[]', space=smem, size = 0x4, offset = 0x4, fixed_abs, tag = 'smem constant byte address 0x4 - core index']
  #allocation1 [shape = 'u32[144,128]{1,0:T(1,128)}', space=vmem, size = 0x12000, scoped, tag = 'internal scratch']
  %s0 = inlined_call_operand.vmem [shape: f32[16,1], index: 0, kind: input, shape index: {}]
  %s1 = inlined_call_operand.vmem [shape: f32[1,256], index: 1, kind: input, shape index: {}]
  %s2 = inlined_call_operand.vmem [shape: f32[1,256], index: 2, kind: input, shape index: {}]
  %s3 = inlined_call_operand.hbm [shape: f32[256,512], index: 3, kind: input, shape index: {}]
  %s4 = inlined_call_operand.vmem [shape: f32[1,512], index: 4, kind: input, shape index: {}]
  %s5 = inlined_call_operand.hbm [shape: f32[512,256], index: 5, kind: input, shape index: {}]
  %s6 = inlined_call_operand.vmem [shape: f32[1,256], index: 6, kind: input, shape index: {}]
  %s7 = inlined_call_operand.vmem [shape: f32[256,2], index: 7, kind: input, shape index: {}]
  %s8 = inlined_call_operand.vmem [shape: f32[1,2], index: 8, kind: input, shape index: {}]
  %s9 = inlined_call_operand.vmem [shape: f32[16,2], index: 9, kind: output, shape index: {}]
  %s10 = sld [smem:[#allocation0]]
  $region54: #{tpu_custom_call.1} parent=0
    _
  %s12 = ssub.s32 1, %s10
  %s13 = scalar_select 0, %s12, %s10
  $region1: #{tpu_custom_call.1} parent=0
    #allocation2 [shape = 'u8[524288]{0}', space=vmem, size = 0x80000, scoped, tag = 'input window, operand 3, single buffered']
    #allocation3 [shape = 's32[1]{0}', space=sflag, size = 0x4, scoped, tag = 'scoped memory for tpu_custom_call.1']
    #allocation4 [shape = 'u8[524288]{0}', space=vmem, size = 0x80000, scoped, tag = 'input window, operand 5, single buffered']
    #allocation5 [shape = 's32[1]{0}', space=sflag, size = 0x4, scoped, tag = 'scoped memory for tpu_custom_call.1']
    %14 = vsyncpa [#allocation3], 0
    %15 = vsyncpa [#allocation5], 0
    // Predicated region
    $region2: #{tpu_custom_call.1} parent=1 // pred_check
      _
    $region3: #{tpu_custom_call.1} parent=1 // pred_check_branch
      %17 = sbr.rel (0) target = $region5
    $region4: #{tpu_custom_call.1} parent=1 // pred_region
      _
    $region5: #{tpu_custom_call.1} parent=1 // pred_fallthru
      _
    // Predicated region
    $region6: #{tpu_custom_call.1} parent=1 // pred_check
      _
    $region7: #{tpu_custom_call.1} parent=1 // pred_check_branch
      %19 = sbr.rel (0) target = $region9
    $region8: #{tpu_custom_call.1} parent=1 // pred_region
      _
    $region9: #{tpu_custom_call.1} parent=1 // pred_fallthru
      _
    // Predicated region
    $region10: #{tpu_custom_call.1} parent=1 // pred_check
      _
    $region11: #{tpu_custom_call.1} parent=1 // pred_check_branch
      %21 = sbr.rel (0) target = $region13
    $region12: #{tpu_custom_call.1} parent=1 // pred_region
      _
    $region13: #{tpu_custom_call.1} parent=1 // pred_fallthru
      _
    // Predicated region
    $region14: #{tpu_custom_call.1} parent=1 // pred_check
      _
    $region15: #{tpu_custom_call.1} parent=1 // pred_check_branch
      %23 = sbr.rel (0) target = $region17
    $region16: #{tpu_custom_call.1} parent=1 // pred_region
      %s25 = ssub.s32 16384, 16384
      %26 = vsyncadd [#allocation3], %s25
      %s27 = sshll.u32 [#allocation2], 4
      %s28 = int_to_ptr.vmem [resolvable:$true] %s27
      %33 = dma.hbm_to_vmem [thread:$0]  %s3, 16384, %s28, [#allocation3], 512, 512, 32
    $region17: #{tpu_custom_call.1} parent=1 // pred_fallthru
      _
    // Predicated region
    $region18: #{tpu_custom_call.1} parent=1 // pred_check
      _
    $region19: #{tpu_custom_call.1} parent=1 // pred_check_branch
      %35 = sbr.rel (0) target = $region21
    $region20: #{tpu_custom_call.1} parent=1 // pred_region
      _
    $region21: #{tpu_custom_call.1} parent=1 // pred_fallthru
      _
    // Predicated region
    $region22: #{tpu_custom_call.1} parent=1 // pred_check
      _
    $region23: #{tpu_custom_call.1} parent=1 // pred_check_branch
      %37 = sbr.rel (0) target = $region25
    $region24: #{tpu_custom_call.1} parent=1 // pred_region
      %s39 = ssub.s32 16384, 16384
      %40 = vsyncadd [#allocation5], %s39
      %s41 = sshll.u32 [#allocation4], 4
      %s42 = int_to_ptr.vmem [resolvable:$true] %s41
      %47 = dma.hbm_to_vmem [thread:$0]  %s5, 16384, %s42, [#allocation5], 256, 256, 16
    $region25: #{tpu_custom_call.1} parent=1 // pred_fallthru
      _
    // Predicated region
    $region26: #{tpu_custom_call.1} parent=1 // pred_check
      _
    $region27: #{tpu_custom_call.1} parent=1 // pred_check_branch
      %49 = sbr.rel (0) target = $region29
    $region28: #{tpu_custom_call.1} parent=1 // pred_region
      _
    $region29: #{tpu_custom_call.1} parent=1 // pred_fallthru
      _
    // Predicated region
    $region30: #{tpu_custom_call.1} parent=1 // pred_check
      _
    $region31: #{tpu_custom_call.1} parent=1 // pred_check_branch
      %51 = sbr.rel (0) target = $region33
    $region32: #{tpu_custom_call.1} parent=1 // pred_region
      _
    $region33: #{tpu_custom_call.1} parent=1 // pred_fallthru
      _
    // Predicated region
    $region34: #{tpu_custom_call.1} parent=1 // pred_check
      _
    $region35: #{tpu_custom_call.1} parent=1 // pred_check_branch
      %53 = sbr.rel (0) target = $region37
    $region36: #{tpu_custom_call.1} parent=1 // pred_region
      _
    $region37: #{tpu_custom_call.1} parent=1 // pred_fallthru
      _
    // Predicated region
    $region38: #{tpu_custom_call.1} parent=1 // pred_check
      _
    $region39: #{tpu_custom_call.1} parent=1 // pred_check_branch
      %55 = sbr.rel (0) target = $region41
    $region40: #{tpu_custom_call.1} parent=1 // pred_region
      %56 = dma.done [#allocation3], 16384
    $region41: #{tpu_custom_call.1} parent=1 // pred_fallthru
      _
    // Predicated region
    $region42: #{tpu_custom_call.1} parent=1 // pred_check
      _
    $region43: #{tpu_custom_call.1} parent=1 // pred_check_branch
      %58 = sbr.rel (0) target = $region45
    $region44: #{tpu_custom_call.1} parent=1 // pred_region
      %59 = dma.done [#allocation5], 16384
    $region45: #{tpu_custom_call.1} parent=1 // pred_fallthru
      _
    %v60 = vld [vmem:[%s0] sm:$0xff]
    %v61 = vld [vmem:[%s0 + $0x8] sm:$0xff]
    %v62 = vld [vmem:[%s1] sm:$0x3]
    %64 = vset.pattern.permute.xlu0 0
    %65 = vperm.xlu0 %64, %v60
    %v66 = vpop.permute.xlu0 %65
    %69 = vset.pattern.permute.xlu0 0
    %70 = vperm.xlu0 %69, %v61
    %v71 = vpop.permute.xlu0 %70
    %v74 = vlaneseq
    %v75 = vshrl.u32 %v74, 7
    %v76 = vsub.s32 0, %v75
    %v77 = vrot.slane %v62, %v76
    %v78 = vlaneseq
    %v79 = vshrl.u32 %v78, 7
    %v80 = vsub.s32 1, %v79
    %v81 = vrot.slane %v62, %v80
    %v84 = vmul.f32 %v66, %v77
    %v85 = vmul.f32 %v66, %v81
    %v86 = vmul.f32 %v71, %v77
    %v87 = vmul.f32 %v71, %v81
    %v88 = vld [vmem:[%s2] sm:$0x3]
    %v90 = vlaneseq
    %v91 = vshrl.u32 %v90, 7
    %v92 = vsub.s32 0, %v91
    %v93 = vrot.slane %v88, %v92
    %v94 = vlaneseq
    %v95 = vshrl.u32 %v94, 7
    %v96 = vsub.s32 1, %v95
    %v97 = vrot.slane %v88, %v96
    %v100 = vadd.f32 %v84, %v93
    %v101 = vadd.f32 %v85, %v97
    %v102 = vadd.f32 %v86, %v93
    %v103 = vadd.f32 %v87, %v97
    %v104 = vmax.f32 %v100, 0.0
    %v105 = vmax.f32 %v101, 0.0
    %v106 = vmax.f32 %v102, 0.0
    %v107 = vmax.f32 %v103, 0.0
    %v108 = vld [vmem:[#allocation2] sm:$0xff]
    %v109 = vld [vmem:[#allocation2 + $0x8] sm:$0xff]
    %v110 = vld [vmem:[#allocation2 + $0x10] sm:$0xff]
    %v111 = vld [vmem:[#allocation2 + $0x18] sm:$0xff]
    %v112 = vld [vmem:[#allocation2 + $0x20] sm:$0xff]
    %v113 = vld [vmem:[#allocation2 + $0x28] sm:$0xff]
    %v114 = vld [vmem:[#allocation2 + $0x30] sm:$0xff]
    %v115 = vld [vmem:[#allocation2 + $0x38] sm:$0xff]
    %v116 = vld [vmem:[#allocation2 + $0x40] sm:$0xff]
    %v117 = vld [vmem:[#allocation2 + $0x48] sm:$0xff]
    %v118 = vld [vmem:[#allocation2 + $0x50] sm:$0xff]
    %v119 = vld [vmem:[#allocation2 + $0x58] sm:$0xff]
    %v120 = vld [vmem:[#allocation2 + $0x60] sm:$0xff]
    %v121 = vld [vmem:[#allocation2 + $0x68] sm:$0xff]
    %v122 = vld [vmem:[#allocation2 + $0x70] sm:$0xff]
    %v123 = vld [vmem:[#allocation2 + $0x78] sm:$0xff]
    %v124 = vld [vmem:[#allocation2 + $0x80] sm:$0xff]
    %v125 = vld [vmem:[#allocation2 + $0x88] sm:$0xff]
    %v126 = vld [vmem:[#allocation2 + $0x90] sm:$0xff]
    %v127 = vld [vmem:[#allocation2 + $0x98] sm:$0xff]
    %v128 = vld [vmem:[#allocation2 + $0xa0] sm:$0xff]
    %v129 = vld [vmem:[#allocation2 + $0xa8] sm:$0xff]
    %v130 = vld [vmem:[#allocation2 + $0xb0] sm:$0xff]
    %v131 = vld [vmem:[#allocation2 + $0xb8] sm:$0xff]
    %v132 = vld [vmem:[#allocation2 + $0xc0] sm:$0xff]
    %v133 = vld [vmem:[#allocation2 + $0xc8] sm:$0xff]
    %v134 = vld [vmem:[#allocation2 + $0xd0] sm:$0xff]
    %v135 = vld [vmem:[#allocation2 + $0xd8] sm:$0xff]
    %v136 = vld [vmem:[#allocation2 + $0xe0] sm:$0xff]
    %v137 = vld [vmem:[#allocation2 + $0xe8] sm:$0xff]
    %v138 = vld [vmem:[#allocation2 + $0xf0] sm:$0xff]
    %v139 = vld [vmem:[#allocation2 + $0xf8] sm:$0xff]
    %v140 = vld [vmem:[#allocation2 + $0x100] sm:$0xff]
    %v141 = vld [vmem:[#allocation2 + $0x108] sm:$0xff]
    %v142 = vld [vmem:[#allocation2 + $0x110] sm:$0xff]
    %v143 = vld [vmem:[#allocation2 + $0x118] sm:$0xff]
    %v144 = vld [vmem:[#allocation2 + $0x120] sm:$0xff]
    %v145 = vld [vmem:[#allocation2 + $0x128] sm:$0xff]
    %v146 = vld [vmem:[#allocation2 + $0x130] sm:$0xff]
    %v147 = vld [vmem:[#allocation2 + $0x138] sm:$0xff]
    %v148 = vld [vmem:[#allocation2 + $0x140] sm:$0xff]
    %v149 = vld [vmem:[#allocation2 + $0x148] sm:$0xff]
    %v150 = vld [vmem:[#allocation2 + $0x150] sm:$0xff]
    %v151 = vld [vmem:[#allocation2 + $0x158] sm:$0xff]
    %v152 = vld [vmem:[#allocation2 + $0x160] sm:$0xff]
    %v153 = vld [vmem:[#allocation2 + $0x168] sm:$0xff]
    %v154 = vld [vmem:[#allocation2 + $0x170] sm:$0xff]
    %v155 = vld [vmem:[#allocation2 + $0x178] sm:$0xff]
    %v156 = vld [vmem:[#allocation2 + $0x180] sm:$0xff]
    %v157 = vld [vmem:[#allocation2 + $0x188] sm:$0xff]
    %v158 = vld [vmem:[#allocation2 + $0x190] sm:$0xff]
    %v159 = vld [vmem:[#allocation2 + $0x198] sm:$0xff]
    %v160 = vld [vmem:[#allocation2 + $0x1a0] sm:$0xff]
    %v161 = vld [vmem:[#allocation2 + $0x1a8] sm:$0xff]
    %v162 = vld [vmem:[#allocation2 + $0x1b0] sm:$0xff]
    %v163 = vld [vmem:[#allocation2 + $0x1b8] sm:$0xff]
    %v164 = vld [vmem:[#allocation2 + $0x1c0] sm:$0xff]
    %v165 = vld [vmem:[#allocation2 + $0x1c8] sm:$0xff]
    %v166 = vld [vmem:[#allocation2 + $0x1d0] sm:$0xff]
    %v167 = vld [vmem:[#allocation2 + $0x1d8] sm:$0xff]
    %v168 = vld [vmem:[#allocation2 + $0x1e0] sm:$0xff]
    %v169 = vld [vmem:[#allocation2 + $0x1e8] sm:$0xff]
    %v170 = vld [vmem:[#allocation2 + $0x1f0] sm:$0xff]
    %v171 = vld [vmem:[#allocation2 + $0x1f8] sm:$0xff]
    %v172 = vld [vmem:[#allocation2 + $0x200] sm:$0xff]
    %v173 = vld [vmem:[#allocation2 + $0x208] sm:$0xff]
    %v174 = vld [vmem:[#allocation2 + $0x210] sm:$0xff]
    %v175 = vld [vmem:[#allocation2 + $0x218] sm:$0xff]
    %v176 = vld [vmem:[#allocation2 + $0x220] sm:$0xff]
    %v177 = vld [vmem:[#allocation2 + $0x228] sm:$0xff]
    %v178 = vld [vmem:[#allocation2 + $0x230] sm:$0xff]
    %v179 = vld [vmem:[#allocation2 + $0x238] sm:$0xff]
    %v180 = vld [vmem:[#allocation2 + $0x240] sm:$0xff]
    %v181 = vld [vmem:[#allocation2 + $0x248] sm:$0xff]
    %v182 = vld [vmem:[#allocation2 + $0x250] sm:$0xff]
    %v183 = vld [vmem:[#allocation2 + $0x258] sm:$0xff]
    %v184 = vld [vmem:[#allocation2 + $0x260] sm:$0xff]
    %v185 = vld [vmem:[#allocation2 + $0x268] sm:$0xff]
    %v186 = vld [vmem:[#allocation2 + $0x270] sm:$0xff]
    %v187 = vld [vmem:[#allocation2 + $0x278] sm:$0xff]
    %v188 = vld [vmem:[#allocation2 + $0x280] sm:$0xff]
    %v189 = vld [vmem:[#allocation2 + $0x288] sm:$0xff]
    %v190 = vld [vmem:[#allocation2 + $0x290] sm:$0xff]
    %v191 = vld [vmem:[#allocation2 + $0x298] sm:$0xff]
    %v192 = vld [vmem:[#allocation2 + $0x2a0] sm:$0xff]
    %v193 = vld [vmem:[#allocation2 + $0x2a8] sm:$0xff]
    %v194 = vld [vmem:[#allocation2 + $0x2b0] sm:$0xff]
    %v195 = vld [vmem:[#allocation2 + $0x2b8] sm:$0xff]
    %v196 = vld [vmem:[#allocation2 + $0x2c0] sm:$0xff]
    %v197 = vld [vmem:[#allocation2 + $0x2c8] sm:$0xff]
    %v198 = vld [vmem:[#allocation2 + $0x2d0] sm:$0xff]
    %v199 = vld [vmem:[#allocation2 + $0x2d8] sm:$0xff]
    %v200 = vld [vmem:[#allocation2 + $0x2e0] sm:$0xff]
    %v201 = vld [vmem:[#allocation2 + $0x2e8] sm:$0xff]
    %v202 = vld [vmem:[#allocation2 + $0x2f0] sm:$0xff]
    %v203 = vld [vmem:[#allocation2 + $0x2f8] sm:$0xff]
    %v204 = vld [vmem:[#allocation2 + $0x300] sm:$0xff]
    %v205 = vld [vmem:[#allocation2 + $0x308] sm:$0xff]
    %v206 = vld [vmem:[#allocation2 + $0x310] sm:$0xff]
    %v207 = vld [vmem:[#allocation2 + $0x318] sm:$0xff]
    %v208 = vld [vmem:[#allocation2 + $0x320] sm:$0xff]
    %v209 = vld [vmem:[#allocation2 + $0x328] sm:$0xff]
    %v210 = vld [vmem:[#allocation2 + $0x330] sm:$0xff]
    %v211 = vld [vmem:[#allocation2 + $0x338] sm:$0xff]
    %v212 = vld [vmem:[#allocation2 + $0x340] sm:$0xff]
    %v213 = vld [vmem:[#allocation2 + $0x348] sm:$0xff]
    %v214 = vld [vmem:[#allocation2 + $0x350] sm:$0xff]
    %v215 = vld [vmem:[#allocation2 + $0x358] sm:$0xff]
    %v216 = vld [vmem:[#allocation2 + $0x360] sm:$0xff]
    %v217 = vld [vmem:[#allocation2 + $0x368] sm:$0xff]
    %v218 = vld [vmem:[#allocation2 + $0x370] sm:$0xff]
    %v219 = vld [vmem:[#allocation2 + $0x378] sm:$0xff]
    %v220 = vld [vmem:[#allocation2 + $0x380] sm:$0xff]
    %v221 = vld [vmem:[#allocation2 + $0x388] sm:$0xff]
    %v222 = vld [vmem:[#allocation2 + $0x390] sm:$0xff]
    %v223 = vld [vmem:[#allocation2 + $0x398] sm:$0xff]
    %v224 = vld [vmem:[#allocation2 + $0x3a0] sm:$0xff]
    %v225 = vld [vmem:[#allocation2 + $0x3a8] sm:$0xff]
    %v226 = vld [vmem:[#allocation2 + $0x3b0] sm:$0xff]
    %v227 = vld [vmem:[#allocation2 + $0x3b8] sm:$0xff]
    %v228 = vld [vmem:[#allocation2 + $0x3c0] sm:$0xff]
    %v229 = vld [vmem:[#allocation2 + $0x3c8] sm:$0xff]
    %v230 = vld [vmem:[#allocation2 + $0x3d0] sm:$0xff]
    %v231 = vld [vmem:[#allocation2 + $0x3d8] sm:$0xff]
    %v232 = vld [vmem:[#allocation2 + $0x3e0] sm:$0xff]
    %v233 = vld [vmem:[#allocation2 + $0x3e8] sm:$0xff]
    %v234 = vld [vmem:[#allocation2 + $0x3f0] sm:$0xff]
    %v235 = vld [vmem:[#allocation2 + $0x3f8] sm:$0xff]
    %v236 = vld [vmem:[%s4] sm:$0xf]
    %v238 = vlaneseq
    %v239 = vshrl.u32 %v238, 7
    %v240 = vsub.s32 0, %v239
    %v241 = vrot.slane %v236, %v240
    %v242 = vlaneseq
    %v243 = vshrl.u32 %v242, 7
    %v244 = vsub.s32 1, %v243
    %v245 = vrot.slane %v236, %v244
    %v246 = vlaneseq
    %v247 = vshrl.u32 %v246, 7
    %v248 = vsub.s32 2, %v247
    %v249 = vrot.slane %v236, %v248
    %v250 = vlaneseq
    %v251 = vshrl.u32 %v250, 7
    %v252 = vsub.s32 3, %v251
    %v253 = vrot.slane %v236, %v252
    %258 = vmatprep.subr.mxu0 %v109
    %259 = vmatpush1.msra.mxu0 %v108
    %260 = vmatprep.subr.mxu0 %v113
    %261 = vmatpush1.msra.mxu0 %v112
    %262 = vmatprep.subr.mxu0 %v117
    %263 = vmatpush1.msra.mxu0 %v116
    %264 = vmatprep.subr.mxu0 %v121
    %265 = vmatpush1.msra.mxu0 %v120
    %266 = vmatprep.subr.mxu0 %v125
    %267 = vmatpush1.msra.mxu0 %v124
    %268 = vmatprep.subr.mxu0 %v129
    %269 = vmatpush1.msra.mxu0 %v128
    %270 = vmatprep.subr.mxu0 %v133
    %271 = vmatpush1.msra.mxu0 %v132
    %272 = vmatprep.subr.mxu0 %v137
    %273 = vmatpush1.msra.mxu0 %v136
    %274 = vmatprep.subr.mxu0 %v141
    %275 = vmatpush1.msra.mxu0 %v140
    %276 = vmatprep.subr.mxu0 %v145
    %277 = vmatpush1.msra.mxu0 %v144
    %278 = vmatprep.subr.mxu0 %v149
    %279 = vmatpush1.msra.mxu0 %v148
    %280 = vmatprep.subr.mxu0 %v153
    %281 = vmatpush1.msra.mxu0 %v152
    %282 = vmatprep.subr.mxu0 %v157
    %283 = vmatpush1.msra.mxu0 %v156
    %284 = vmatprep.subr.mxu0 %v161
    %285 = vmatpush1.msra.mxu0 %v160
    %286 = vmatprep.subr.mxu0 %v165
    %287 = vmatpush1.msra.mxu0 %v164
    %288 = vmatprep.subr.mxu0 %v169
    %289 = vmatpush1.msra.mxu0 %v168
    %290 = vmatprep.subr.mxu0 %v173
    %291 = vmatpush1.msra.mxu0 %v172
    %292 = vmatprep.subr.mxu0 %v177
    %293 = vmatpush1.msra.mxu0 %v176
    %294 = vmatprep.subr.mxu0 %v181
    %295 = vmatpush1.msra.mxu0 %v180
    %296 = vmatprep.subr.mxu0 %v185
    %297 = vmatpush1.msra.mxu0 %v184
    %298 = vmatprep.subr.mxu0 %v189
    %299 = vmatpush1.msra.mxu0 %v188
    %300 = vmatprep.subr.mxu0 %v193
    %301 = vmatpush1.msra.mxu0 %v192
    %302 = vmatprep.subr.mxu0 %v197
    %303 = vmatpush1.msra.mxu0 %v196
    %304 = vmatprep.subr.mxu0 %v201
    %305 = vmatpush1.msra.mxu0 %v200
    %306 = vmatprep.subr.mxu0 %v205
    %307 = vmatpush1.msra.mxu0 %v204
    %308 = vmatprep.subr.mxu0 %v209
    %309 = vmatpush1.msra.mxu0 %v208
    %310 = vmatprep.subr.mxu0 %v213
    %311 = vmatpush1.msra.mxu0 %v212
    %312 = vmatprep.subr.mxu0 %v217
    %313 = vmatpush1.msra.mxu0 %v216
    %314 = vmatprep.subr.mxu0 %v221
    %315 = vmatpush1.msra.mxu0 %v220
    %316 = vmatprep.subr.mxu0 %v225
    %317 = vmatpush1.msra.mxu0 %v224
    %318 = vmatprep.subr.mxu0 %v229
    %319 = vmatpush1.msra.mxu0 %v228
    %320 = vmatprep.subr.mxu0 %v233
    %321 = vmatpush1.msra.mxu0 %v232
    %322 = vmatprep.mubr.f32.mxu0 %v105
    %323 = vmatmul.mubr.f32.gmra.mrb[0].mxu0 %v104
    %v324 = vpop.f32.mrb[0].mxu0
    %v325 = vadd.f32 %v241, %v324
    %v326 = vpop.f32.mrb[0].mxu0
    %v327 = vadd.f32 %v245, %v326
    %328 = vmatprep.mubr.f32.mxu0 %v107
    %329 = vmatmul.mubr.f32.gmra.mrb[0].mxu0 %v106
    %v330 = vpop.f32.mrb[0].mxu0
    %v331 = vadd.f32 %v241, %v330
    %v332 = vpop.f32.mrb[0].mxu0
    %v333 = vadd.f32 %v245, %v332
    %334 = vdwg.mxu0
    %335 = vmatprep.subr.mxu0 %v111
    %336 = vmatpush1.msra.mxu0 %v110
    %337 = vmatprep.subr.mxu0 %v115
    %338 = vmatpush1.msra.mxu0 %v114
    %339 = vmatprep.subr.mxu0 %v119
    %340 = vmatpush1.msra.mxu0 %v118
    %341 = vmatprep.subr.mxu0 %v123
    %342 = vmatpush1.msra.mxu0 %v122
    %343 = vmatprep.subr.mxu0 %v127
    %344 = vmatpush1.msra.mxu0 %v126
    %345 = vmatprep.subr.mxu0 %v131
    %346 = vmatpush1.msra.mxu0 %v130
    %347 = vmatprep.subr.mxu0 %v135
    %348 = vmatpush1.msra.mxu0 %v134
    %349 = vmatprep.subr.mxu0 %v139
    %350 = vmatpush1.msra.mxu0 %v138
    %351 = vmatprep.subr.mxu0 %v143
    %352 = vmatpush1.msra.mxu0 %v142
    %353 = vmatprep.subr.mxu0 %v147
    %354 = vmatpush1.msra.mxu0 %v146
    %355 = vmatprep.subr.mxu0 %v151
    %356 = vmatpush1.msra.mxu0 %v150
    %357 = vmatprep.subr.mxu0 %v155
    %358 = vmatpush1.msra.mxu0 %v154
    %359 = vmatprep.subr.mxu0 %v159
    %360 = vmatpush1.msra.mxu0 %v158
    %361 = vmatprep.subr.mxu0 %v163
    %362 = vmatpush1.msra.mxu0 %v162
    %363 = vmatprep.subr.mxu0 %v167
    %364 = vmatpush1.msra.mxu0 %v166
    %365 = vmatprep.subr.mxu0 %v171
    %366 = vmatpush1.msra.mxu0 %v170
    %367 = vmatprep.subr.mxu0 %v175
    %368 = vmatpush1.msra.mxu0 %v174
    %369 = vmatprep.subr.mxu0 %v179
    %370 = vmatpush1.msra.mxu0 %v178
    %371 = vmatprep.subr.mxu0 %v183
    %372 = vmatpush1.msra.mxu0 %v182
    %373 = vmatprep.subr.mxu0 %v187
    %374 = vmatpush1.msra.mxu0 %v186
    %375 = vmatprep.subr.mxu0 %v191
    %376 = vmatpush1.msra.mxu0 %v190
    %377 = vmatprep.subr.mxu0 %v195
    %378 = vmatpush1.msra.mxu0 %v194
    %379 = vmatprep.subr.mxu0 %v199
    %380 = vmatpush1.msra.mxu0 %v198
    %381 = vmatprep.subr.mxu0 %v203
    %382 = vmatpush1.msra.mxu0 %v202
    %383 = vmatprep.subr.mxu0 %v207
    %384 = vmatpush1.msra.mxu0 %v206
    %385 = vmatprep.subr.mxu0 %v211
    %386 = vmatpush1.msra.mxu0 %v210
    %387 = vmatprep.subr.mxu0 %v215
    %388 = vmatpush1.msra.mxu0 %v214
    %389 = vmatprep.subr.mxu0 %v219
    %390 = vmatpush1.msra.mxu0 %v218
    %391 = vmatprep.subr.mxu0 %v223
    %392 = vmatpush1.msra.mxu0 %v222
    %393 = vmatprep.subr.mxu0 %v227
    %394 = vmatpush1.msra.mxu0 %v226
    %395 = vmatprep.subr.mxu0 %v231
    %396 = vmatpush1.msra.mxu0 %v230
    %397 = vmatprep.subr.mxu0 %v235
    %398 = vmatpush1.msra.mxu0 %v234
    %399 = vmatprep.mubr.f32.mxu0 %v105
    %400 = vmatmul.mubr.f32.gmra.mrb[0].mxu0 %v104
    %v401 = vpop.f32.mrb[0].mxu0
    %v402 = vadd.f32 %v249, %v401
    %v403 = vpop.f32.mrb[0].mxu0
    %v404 = vadd.f32 %v253, %v403
    %405 = vmatprep.mubr.f32.mxu0 %v107
    %406 = vmatmul.mubr.f32.gmra.mrb[0].mxu0 %v106
    %v407 = vpop.f32.mrb[0].mxu0
    %v408 = vadd.f32 %v249, %v407
    %v409 = vpop.f32.mrb[0].mxu0
    %v410 = vadd.f32 %v253, %v409
    %411 = vdwg.mxu0
    %v412 = vmax.f32 %v325, 0.0
    %v413 = vmax.f32 %v327, 0.0
    %v414 = vmax.f32 %v402, 0.0
    %v415 = vmax.f32 %v404, 0.0
    %v416 = vmax.f32 %v331, 0.0
    %v417 = vmax.f32 %v333, 0.0
    %v418 = vmax.f32 %v408, 0.0
    %v419 = vmax.f32 %v410, 0.0
    %v420 = vld [vmem:[#allocation4] sm:$0xff]
    %v421 = vld [vmem:[#allocation4 + $0x8] sm:$0xff]
    %v422 = vld [vmem:[#allocation4 + $0x10] sm:$0xff]
    %v423 = vld [vmem:[#allocation4 + $0x18] sm:$0xff]
    %v424 = vld [vmem:[#allocation4 + $0x20] sm:$0xff]
    %v425 = vld [vmem:[#allocation4 + $0x28] sm:$0xff]
    %v426 = vld [vmem:[#allocation4 + $0x30] sm:$0xff]
    %v427 = vld [vmem:[#allocation4 + $0x38] sm:$0xff]
    %v428 = vld [vmem:[#allocation4 + $0x40] sm:$0xff]
    %v429 = vld [vmem:[#allocation4 + $0x48] sm:$0xff]
    %v430 = vld [vmem:[#allocation4 + $0x50] sm:$0xff]
    %v431 = vld [vmem:[#allocation4 + $0x58] sm:$0xff]
    %v432 = vld [vmem:[#allocation4 + $0x60] sm:$0xff]
    %v433 = vld [vmem:[#allocation4 + $0x68] sm:$0xff]
    %v434 = vld [vmem:[#allocation4 + $0x70] sm:$0xff]
    %v435 = vld [vmem:[#allocation4 + $0x78] sm:$0xff]
    %v436 = vld [vmem:[#allocation4 + $0x80] sm:$0xff]
    %v437 = vld [vmem:[#allocation4 + $0x88] sm:$0xff]
    %v438 = vld [vmem:[#allocation4 + $0x90] sm:$0xff]
    %v439 = vld [vmem:[#allocation4 + $0x98] sm:$0xff]
    %v440 = vld [vmem:[#allocation4 + $0xa0] sm:$0xff]
    %v441 = vld [vmem:[#allocation4 + $0xa8] sm:$0xff]
    %v442 = vld [vmem:[#allocation4 + $0xb0] sm:$0xff]
    %v443 = vld [vmem:[#allocation4 + $0xb8] sm:$0xff]
    %v444 = vld [vmem:[#allocation4 + $0xc0] sm:$0xff]
    %v445 = vld [vmem:[#allocation4 + $0xc8] sm:$0xff]
    %v446 = vld [vmem:[#allocation4 + $0xd0] sm:$0xff]
    %v447 = vld [vmem:[#allocation4 + $0xd8] sm:$0xff]
    %v448 = vld [vmem:[#allocation4 + $0xe0] sm:$0xff]
    %v449 = vld [vmem:[#allocation4 + $0xe8] sm:$0xff]
    %v450 = vld [vmem:[#allocation4 + $0xf0] sm:$0xff]
    %v451 = vld [vmem:[#allocation4 + $0xf8] sm:$0xff]
    %v452 = vld [vmem:[#allocation4 + $0x100] sm:$0xff]
    %v453 = vld [vmem:[#allocation4 + $0x108] sm:$0xff]
    %v454 = vld [vmem:[#allocation4 + $0x110] sm:$0xff]
    %v455 = vld [vmem:[#allocation4 + $0x118] sm:$0xff]
    %v456 = vld [vmem:[#allocation4 + $0x120] sm:$0xff]
    %v457 = vld [vmem:[#allocation4 + $0x128] sm:$0xff]
    %v458 = vld [vmem:[#allocation4 + $0x130] sm:$0xff]
    %v459 = vld [vmem:[#allocation4 + $0x138] sm:$0xff]
    %v460 = vld [vmem:[#allocation4 + $0x140] sm:$0xff]
    %v461 = vld [vmem:[#allocation4 + $0x148] sm:$0xff]
    %v462 = vld [vmem:[#allocation4 + $0x150] sm:$0xff]
    %v463 = vld [vmem:[#allocation4 + $0x158] sm:$0xff]
    %v464 = vld [vmem:[#allocation4 + $0x160] sm:$0xff]
    %v465 = vld [vmem:[#allocation4 + $0x168] sm:$0xff]
    %v466 = vld [vmem:[#allocation4 + $0x170] sm:$0xff]
    %v467 = vld [vmem:[#allocation4 + $0x178] sm:$0xff]
    %v468 = vld [vmem:[#allocation4 + $0x180] sm:$0xff]
    %v469 = vld [vmem:[#allocation4 + $0x188] sm:$0xff]
    %v470 = vld [vmem:[#allocation4 + $0x190] sm:$0xff]
    %v471 = vld [vmem:[#allocation4 + $0x198] sm:$0xff]
    %v472 = vld [vmem:[#allocation4 + $0x1a0] sm:$0xff]
    %v473 = vld [vmem:[#allocation4 + $0x1a8] sm:$0xff]
    %v474 = vld [vmem:[#allocation4 + $0x1b0] sm:$0xff]
    %v475 = vld [vmem:[#allocation4 + $0x1b8] sm:$0xff]
    %v476 = vld [vmem:[#allocation4 + $0x1c0] sm:$0xff]
    %v477 = vld [vmem:[#allocation4 + $0x1c8] sm:$0xff]
    %v478 = vld [vmem:[#allocation4 + $0x1d0] sm:$0xff]
    %v479 = vld [vmem:[#allocation4 + $0x1d8] sm:$0xff]
    %v480 = vld [vmem:[#allocation4 + $0x1e0] sm:$0xff]
    %v481 = vld [vmem:[#allocation4 + $0x1e8] sm:$0xff]
    %v482 = vld [vmem:[#allocation4 + $0x1f0] sm:$0xff]
    %v483 = vld [vmem:[#allocation4 + $0x1f8] sm:$0xff]
    %v484 = vld [vmem:[#allocation4 + $0x200] sm:$0xff]
    %v485 = vld [vmem:[#allocation4 + $0x208] sm:$0xff]
    %v486 = vld [vmem:[#allocation4 + $0x210] sm:$0xff]
    %v487 = vld [vmem:[#allocation4 + $0x218] sm:$0xff]
    %v488 = vld [vmem:[#allocation4 + $0x220] sm:$0xff]
    %v489 = vld [vmem:[#allocation4 + $0x228] sm:$0xff]
    %v490 = vld [vmem:[#allocation4 + $0x230] sm:$0xff]
    %v491 = vld [vmem:[#allocation4 + $0x238] sm:$0xff]
    %v492 = vld [vmem:[#allocation4 + $0x240] sm:$0xff]
    %v493 = vld [vmem:[#allocation4 + $0x248] sm:$0xff]
    %v494 = vld [vmem:[#allocation4 + $0x250] sm:$0xff]
    %v495 = vld [vmem:[#allocation4 + $0x258] sm:$0xff]
    %v496 = vld [vmem:[#allocation4 + $0x260] sm:$0xff]
    %v497 = vld [vmem:[#allocation4 + $0x268] sm:$0xff]
    %v498 = vld [vmem:[#allocation4 + $0x270] sm:$0xff]
    %v499 = vld [vmem:[#allocation4 + $0x278] sm:$0xff]
    %v500 = vld [vmem:[#allocation4 + $0x280] sm:$0xff]
    %v501 = vld [vmem:[#allocation4 + $0x288] sm:$0xff]
    %v502 = vld [vmem:[#allocation4 + $0x290] sm:$0xff]
    %v503 = vld [vmem:[#allocation4 + $0x298] sm:$0xff]
    %v504 = vld [vmem:[#allocation4 + $0x2a0] sm:$0xff]
    %v505 = vld [vmem:[#allocation4 + $0x2a8] sm:$0xff]
    %v506 = vld [vmem:[#allocation4 + $0x2b0] sm:$0xff]
    %v507 = vld [vmem:[#allocation4 + $0x2b8] sm:$0xff]
    %v508 = vld [vmem:[#allocation4 + $0x2c0] sm:$0xff]
    %v509 = vld [vmem:[#allocation4 + $0x2c8] sm:$0xff]
    %v510 = vld [vmem:[#allocation4 + $0x2d0] sm:$0xff]
    %v511 = vld [vmem:[#allocation4 + $0x2d8] sm:$0xff]
    %v512 = vld [vmem:[#allocation4 + $0x2e0] sm:$0xff]
    %v513 = vld [vmem:[#allocation4 + $0x2e8] sm:$0xff]
    %v514 = vld [vmem:[#allocation4 + $0x2f0] sm:$0xff]
    %v515 = vld [vmem:[#allocation4 + $0x2f8] sm:$0xff]
    %v516 = vld [vmem:[#allocation4 + $0x300] sm:$0xff]
    %v517 = vld [vmem:[#allocation4 + $0x308] sm:$0xff]
    %v518 = vld [vmem:[#allocation4 + $0x310] sm:$0xff]
    %v519 = vld [vmem:[#allocation4 + $0x318] sm:$0xff]
    %v520 = vld [vmem:[#allocation4 + $0x320] sm:$0xff]
    %v521 = vld [vmem:[#allocation4 + $0x328] sm:$0xff]
    %v522 = vld [vmem:[#allocation4 + $0x330] sm:$0xff]
    %v523 = vld [vmem:[#allocation4 + $0x338] sm:$0xff]
    %v524 = vld [vmem:[#allocation4 + $0x340] sm:$0xff]
    %v525 = vld [vmem:[#allocation4 + $0x348] sm:$0xff]
    %v526 = vld [vmem:[#allocation4 + $0x350] sm:$0xff]
    %v527 = vld [vmem:[#allocation4 + $0x358] sm:$0xff]
    %v528 = vld [vmem:[#allocation4 + $0x360] sm:$0xff]
    %v529 = vld [vmem:[#allocation4 + $0x368] sm:$0xff]
    %v530 = vld [vmem:[#allocation4 + $0x370] sm:$0xff]
    %v531 = vld [vmem:[#allocation4 + $0x378] sm:$0xff]
    %v532 = vld [vmem:[#allocation4 + $0x380] sm:$0xff]
    %v533 = vld [vmem:[#allocation4 + $0x388] sm:$0xff]
    %v534 = vld [vmem:[#allocation4 + $0x390] sm:$0xff]
    %v535 = vld [vmem:[#allocation4 + $0x398] sm:$0xff]
    %v536 = vld [vmem:[#allocation4 + $0x3a0] sm:$0xff]
    %v537 = vld [vmem:[#allocation4 + $0x3a8] sm:$0xff]
    %v538 = vld [vmem:[#allocation4 + $0x3b0] sm:$0xff]
    %v539 = vld [vmem:[#allocation4 + $0x3b8] sm:$0xff]
    %v540 = vld [vmem:[#allocation4 + $0x3c0] sm:$0xff]
    %v541 = vld [vmem:[#allocation4 + $0x3c8] sm:$0xff]
    %v542 = vld [vmem:[#allocation4 + $0x3d0] sm:$0xff]
    %v543 = vld [vmem:[#allocation4 + $0x3d8] sm:$0xff]
    %v544 = vld [vmem:[#allocation4 + $0x3e0] sm:$0xff]
    %v545 = vld [vmem:[#allocation4 + $0x3e8] sm:$0xff]
    %v546 = vld [vmem:[#allocation4 + $0x3f0] sm:$0xff]
    %v547 = vld [vmem:[#allocation4 + $0x3f8] sm:$0xff]
    %v548 = vld [vmem:[%s6] sm:$0x3]
    %v550 = vlaneseq
    %v551 = vshrl.u32 %v550, 7
    %v552 = vsub.s32 0, %v551
    %v553 = vrot.slane %v548, %v552
    %v554 = vlaneseq
    %v555 = vshrl.u32 %v554, 7
    %v556 = vsub.s32 1, %v555
    %v557 = vrot.slane %v548, %v556
    %560 = vmatprep.subr.mxu0 %v421
    %561 = vmatpush1.msra.mxu0 %v420
    %562 = vmatprep.subr.mxu0 %v423
    %563 = vmatpush1.msra.mxu0 %v422
    %564 = vmatprep.subr.mxu0 %v425
    %565 = vmatpush1.msra.mxu0 %v424
    %566 = vmatprep.subr.mxu0 %v427
    %567 = vmatpush1.msra.mxu0 %v426
    %568 = vmatprep.subr.mxu0 %v429
    %569 = vmatpush1.msra.mxu0 %v428
    %570 = vmatprep.subr.mxu0 %v431
    %571 = vmatpush1.msra.mxu0 %v430
    %572 = vmatprep.subr.mxu0 %v433
    %573 = vmatpush1.msra.mxu0 %v432
    %574 = vmatprep.subr.mxu0 %v435
    %575 = vmatpush1.msra.mxu0 %v434
    %576 = vmatprep.subr.mxu0 %v437
    %577 = vmatpush1.msra.mxu0 %v436
    %578 = vmatprep.subr.mxu0 %v439
    %579 = vmatpush1.msra.mxu0 %v438
    %580 = vmatprep.subr.mxu0 %v441
    %581 = vmatpush1.msra.mxu0 %v440
    %582 = vmatprep.subr.mxu0 %v443
    %583 = vmatpush1.msra.mxu0 %v442
    %584 = vmatprep.subr.mxu0 %v445
    %585 = vmatpush1.msra.mxu0 %v444
    %586 = vmatprep.subr.mxu0 %v447
    %587 = vmatpush1.msra.mxu0 %v446
    %588 = vmatprep.subr.mxu0 %v449
    %589 = vmatpush1.msra.mxu0 %v448
    %590 = vmatprep.subr.mxu0 %v451
    %591 = vmatpush1.msra.mxu0 %v450
    %592 = vmatprep.subr.mxu0 %v453
    %593 = vmatpush1.msra.mxu0 %v452
    %594 = vmatprep.subr.mxu0 %v455
    %595 = vmatpush1.msra.mxu0 %v454
    %596 = vmatprep.subr.mxu0 %v457
    %597 = vmatpush1.msra.mxu0 %v456
    %598 = vmatprep.subr.mxu0 %v459
    %599 = vmatpush1.msra.mxu0 %v458
    %600 = vmatprep.subr.mxu0 %v461
    %601 = vmatpush1.msra.mxu0 %v460
    %602 = vmatprep.subr.mxu0 %v463
    %603 = vmatpush1.msra.mxu0 %v462
    %604 = vmatprep.subr.mxu0 %v465
    %605 = vmatpush1.msra.mxu0 %v464
    %606 = vmatprep.subr.mxu0 %v467
    %607 = vmatpush1.msra.mxu0 %v466
    %608 = vmatprep.subr.mxu0 %v469
    %609 = vmatpush1.msra.mxu0 %v468
    %610 = vmatprep.subr.mxu0 %v471
    %611 = vmatpush1.msra.mxu0 %v470
    %612 = vmatprep.subr.mxu0 %v473
    %613 = vmatpush1.msra.mxu0 %v472
    %614 = vmatprep.subr.mxu0 %v475
    %615 = vmatpush1.msra.mxu0 %v474
    %616 = vmatprep.subr.mxu0 %v477
    %617 = vmatpush1.msra.mxu0 %v476
    %618 = vmatprep.subr.mxu0 %v479
    %619 = vmatpush1.msra.mxu0 %v478
    %620 = vmatprep.subr.mxu0 %v481
    %621 = vmatpush1.msra.mxu0 %v480
    %622 = vmatprep.subr.mxu0 %v483
    %623 = vmatpush1.msra.mxu0 %v482
    %624 = vmatprep.mubr.f32.mxu0 %v413
    %625 = vmatmul.mubr.f32.gmra.mrb[0].mxu0 %v412
    %v626 = vpop.f32.mrb[0].mxu0
    %v627 = vadd.f32 %v553, %v626
    %v628 = vpop.f32.mrb[0].mxu0
    %v629 = vadd.f32 %v557, %v628
    %630 = vmatprep.mubr.f32.mxu0 %v417
    %631 = vmatmul.mubr.f32.gmra.mrb[0].mxu0 %v416
    %v632 = vpop.f32.mrb[0].mxu0
    %v633 = vadd.f32 %v553, %v632
    %v634 = vpop.f32.mrb[0].mxu0
    %v635 = vadd.f32 %v557, %v634
    %636 = vdwg.mxu0
    %637 = vmatprep.subr.mxu0 %v485
    %638 = vmatpush1.msra.mxu0 %v484
    %639 = vmatprep.subr.mxu0 %v487
    %640 = vmatpush1.msra.mxu0 %v486
    %641 = vmatprep.subr.mxu0 %v489
    %642 = vmatpush1.msra.mxu0 %v488
    %643 = vmatprep.subr.mxu0 %v491
    %644 = vmatpush1.msra.mxu0 %v490
    %645 = vmatprep.subr.mxu0 %v493
    %646 = vmatpush1.msra.mxu0 %v492
    %647 = vmatprep.subr.mxu0 %v495
    %648 = vmatpush1.msra.mxu0 %v494
    %649 = vmatprep.subr.mxu0 %v497
    %650 = vmatpush1.msra.mxu0 %v496
    %651 = vmatprep.subr.mxu0 %v499
    %652 = vmatpush1.msra.mxu0 %v498
    %653 = vmatprep.subr.mxu0 %v501
    %654 = vmatpush1.msra.mxu0 %v500
    %655 = vmatprep.subr.mxu0 %v503
    %656 = vmatpush1.msra.mxu0 %v502
    %657 = vmatprep.subr.mxu0 %v505
    %658 = vmatpush1.msra.mxu0 %v504
    %659 = vmatprep.subr.mxu0 %v507
    %660 = vmatpush1.msra.mxu0 %v506
    %661 = vmatprep.subr.mxu0 %v509
    %662 = vmatpush1.msra.mxu0 %v508
    %663 = vmatprep.subr.mxu0 %v511
    %664 = vmatpush1.msra.mxu0 %v510
    %665 = vmatprep.subr.mxu0 %v513
    %666 = vmatpush1.msra.mxu0 %v512
    %667 = vmatprep.subr.mxu0 %v515
    %668 = vmatpush1.msra.mxu0 %v514
    %669 = vmatprep.subr.mxu0 %v517
    %670 = vmatpush1.msra.mxu0 %v516
    %671 = vmatprep.subr.mxu0 %v519
    %672 = vmatpush1.msra.mxu0 %v518
    %673 = vmatprep.subr.mxu0 %v521
    %674 = vmatpush1.msra.mxu0 %v520
    %675 = vmatprep.subr.mxu0 %v523
    %676 = vmatpush1.msra.mxu0 %v522
    %677 = vmatprep.subr.mxu0 %v525
    %678 = vmatpush1.msra.mxu0 %v524
    %679 = vmatprep.subr.mxu0 %v527
    %680 = vmatpush1.msra.mxu0 %v526
    %681 = vmatprep.subr.mxu0 %v529
    %682 = vmatpush1.msra.mxu0 %v528
    %683 = vmatprep.subr.mxu0 %v531
    %684 = vmatpush1.msra.mxu0 %v530
    %685 = vmatprep.subr.mxu0 %v533
    %686 = vmatpush1.msra.mxu0 %v532
    %687 = vmatprep.subr.mxu0 %v535
    %688 = vmatpush1.msra.mxu0 %v534
    %689 = vmatprep.subr.mxu0 %v537
    %690 = vmatpush1.msra.mxu0 %v536
    %691 = vmatprep.subr.mxu0 %v539
    %692 = vmatpush1.msra.mxu0 %v538
    %693 = vmatprep.subr.mxu0 %v541
    %694 = vmatpush1.msra.mxu0 %v540
    %695 = vmatprep.subr.mxu0 %v543
    %696 = vmatpush1.msra.mxu0 %v542
    %697 = vmatprep.subr.mxu0 %v545
    %698 = vmatpush1.msra.mxu0 %v544
    %699 = vmatprep.subr.mxu0 %v547
    %700 = vmatpush1.msra.mxu0 %v546
    %701 = vmatprep.mubr.f32.mxu0 %v415
    %702 = vmatmul.mubr.f32.gmra.mrb[0].mxu0 %v414
    %v703 = vpop.f32.mrb[0].mxu0
    %v704 = vadd.f32 %v627, %v703
    %v705 = vpop.f32.mrb[0].mxu0
    %v706 = vadd.f32 %v629, %v705
    %707 = vmatprep.mubr.f32.mxu0 %v419
    %708 = vmatmul.mubr.f32.gmra.mrb[0].mxu0 %v418
    %v709 = vpop.f32.mrb[0].mxu0
    %v710 = vadd.f32 %v633, %v709
    %v711 = vpop.f32.mrb[0].mxu0
    %v712 = vadd.f32 %v635, %v711
    %713 = vdwg.mxu0
    %v714 = vmax.f32 %v704, 0.0
    %v715 = vmax.f32 %v706, 0.0
    %v716 = vmax.f32 %v710, 0.0
    %v717 = vmax.f32 %v712, 0.0
    %v718 = vld [vmem:[%s7] sm:$0xff]
    %v719 = vld [vmem:[%s7 + $0x8] sm:$0xff]
    %v720 = vld [vmem:[%s7 + $0x10] sm:$0xff]
    %v721 = vld [vmem:[%s7 + $0x18] sm:$0xff]
    %v722 = vld [vmem:[%s7 + $0x20] sm:$0xff]
    %v723 = vld [vmem:[%s7 + $0x28] sm:$0xff]
    %v724 = vld [vmem:[%s7 + $0x30] sm:$0xff]
    %v725 = vld [vmem:[%s7 + $0x38] sm:$0xff]
    %v726 = vld [vmem:[%s7 + $0x40] sm:$0xff]
    %v727 = vld [vmem:[%s7 + $0x48] sm:$0xff]
    %v728 = vld [vmem:[%s7 + $0x50] sm:$0xff]
    %v729 = vld [vmem:[%s7 + $0x58] sm:$0xff]
    %v730 = vld [vmem:[%s7 + $0x60] sm:$0xff]
    %v731 = vld [vmem:[%s7 + $0x68] sm:$0xff]
    %v732 = vld [vmem:[%s7 + $0x70] sm:$0xff]
    %v733 = vld [vmem:[%s7 + $0x78] sm:$0xff]
    %v734 = vld [vmem:[%s7 + $0x80] sm:$0xff]
    %v735 = vld [vmem:[%s7 + $0x88] sm:$0xff]
    %v736 = vld [vmem:[%s7 + $0x90] sm:$0xff]
    %v737 = vld [vmem:[%s7 + $0x98] sm:$0xff]
    %v738 = vld [vmem:[%s7 + $0xa0] sm:$0xff]
    %v739 = vld [vmem:[%s7 + $0xa8] sm:$0xff]
    %v740 = vld [vmem:[%s7 + $0xb0] sm:$0xff]
    %v741 = vld [vmem:[%s7 + $0xb8] sm:$0xff]
    %v742 = vld [vmem:[%s7 + $0xc0] sm:$0xff]
    %v743 = vld [vmem:[%s7 + $0xc8] sm:$0xff]
    %v744 = vld [vmem:[%s7 + $0xd0] sm:$0xff]
    %v745 = vld [vmem:[%s7 + $0xd8] sm:$0xff]
    %v746 = vld [vmem:[%s7 + $0xe0] sm:$0xff]
    %v747 = vld [vmem:[%s7 + $0xe8] sm:$0xff]
    %v748 = vld [vmem:[%s7 + $0xf0] sm:$0xff]
    %v749 = vld [vmem:[%s7 + $0xf8] sm:$0xff]
    %v750 = vld [vmem:[%s8] sm:$0x1]
    %v752 = vlaneseq
    %v753 = vshrl.u32 %v752, 7
    %v754 = vsub.s32 0, %v753
    %v755 = vrot.slane %v750, %v754
    %757 = vmatprep.subr.mxu0 0.0
    %758 = vmatpush1.msra.mxu0 %v718
    %759 = vmatprep.subr.mxu0 0.0
    %760 = vmatpush1.msra.mxu0 %v719
    %761 = vmatprep.subr.mxu0 0.0
    %762 = vmatpush1.msra.mxu0 %v720
    %763 = vmatprep.subr.mxu0 0.0
    %764 = vmatpush1.msra.mxu0 %v721
    %765 = vmatprep.subr.mxu0 0.0
    %766 = vmatpush1.msra.mxu0 %v722
    %767 = vmatprep.subr.mxu0 0.0
    %768 = vmatpush1.msra.mxu0 %v723
    %769 = vmatprep.subr.mxu0 0.0
    %770 = vmatpush1.msra.mxu0 %v724
    %771 = vmatprep.subr.mxu0 0.0
    %772 = vmatpush1.msra.mxu0 %v725
    %773 = vmatprep.subr.mxu0 0.0
    %774 = vmatpush1.msra.mxu0 %v726
    %775 = vmatprep.subr.mxu0 0.0
    %776 = vmatpush1.msra.mxu0 %v727
    %777 = vmatprep.subr.mxu0 0.0
    %778 = vmatpush1.msra.mxu0 %v728
    %779 = vmatprep.subr.mxu0 0.0
    %780 = vmatpush1.msra.mxu0 %v729
    %781 = vmatprep.subr.mxu0 0.0
    %782 = vmatpush1.msra.mxu0 %v730
    %783 = vmatprep.subr.mxu0 0.0
    %784 = vmatpush1.msra.mxu0 %v731
    %785 = vmatprep.subr.mxu0 0.0
    %786 = vmatpush1.msra.mxu0 %v732
    %787 = vmatprep.subr.mxu0 0.0
    %788 = vmatpush1.msra.mxu0 %v733
    %789 = vmatprep.subr.mxu0 0.0
    %790 = vmatpush1.msra.mxu0 %v734
    %791 = vmatprep.subr.mxu0 0.0
    %792 = vmatpush1.msra.mxu0 %v735
    %793 = vmatprep.subr.mxu0 0.0
    %794 = vmatpush1.msra.mxu0 %v736
    %795 = vmatprep.subr.mxu0 0.0
    %796 = vmatpush1.msra.mxu0 %v737
    %797 = vmatprep.subr.mxu0 0.0
    %798 = vmatpush1.msra.mxu0 %v738
    %799 = vmatprep.subr.mxu0 0.0
    %800 = vmatpush1.msra.mxu0 %v739
    %801 = vmatprep.subr.mxu0 0.0
    %802 = vmatpush1.msra.mxu0 %v740
    %803 = vmatprep.subr.mxu0 0.0
    %804 = vmatpush1.msra.mxu0 %v741
    %805 = vmatprep.subr.mxu0 0.0
    %806 = vmatpush1.msra.mxu0 %v742
    %807 = vmatprep.subr.mxu0 0.0
    %808 = vmatpush1.msra.mxu0 %v743
    %809 = vmatprep.subr.mxu0 0.0
    %810 = vmatpush1.msra.mxu0 %v744
    %811 = vmatprep.subr.mxu0 0.0
    %812 = vmatpush1.msra.mxu0 %v745
    %813 = vmatprep.subr.mxu0 0.0
    %814 = vmatpush1.msra.mxu0 %v746
    %815 = vmatprep.subr.mxu0 0.0
    %816 = vmatpush1.msra.mxu0 %v747
    %817 = vmatprep.subr.mxu0 0.0
    %818 = vmatpush1.msra.mxu0 %v748
    %819 = vmatprep.subr.mxu0 0.0
    %820 = vmatpush1.msra.mxu0 %v749
    %821 = vmatprep.mubr.f32.mxu0 %v715
    %822 = vmatmul.mubr.f32.gmra.mrb[0].mxu0 %v714
    %v823 = vpop.f32.mrb[0].mxu0
    %v824 = vadd.f32 %v755, %v823
    %v825 = vpop.f32.mrb[0].mxu0
    %826 = vmatprep.mubr.f32.mxu0 %v717
    %827 = vmatmul.mubr.f32.gmra.mrb[0].mxu0 %v716
    %v828 = vpop.f32.mrb[0].mxu0
    %v829 = vadd.f32 %v755, %v828
    %v830 = vpop.f32.mrb[0].mxu0
    %831 = vdwg.mxu0
    %vm832 = vcmask 15360
    %833 = vst.msk [vmem:[%s9] sm:$0xff] %vm832, %v824
    %834 = vst.msk [vmem:[%s9 + $0x8] sm:$0xff] %vm832, %v829
    // Predicated region
    $region46: #{tpu_custom_call.1} parent=1 // pred_check
      _
    $region47: #{tpu_custom_call.1} parent=1 // pred_check_branch
      %836 = sbr.rel (0) target = $region49
    $region48: #{tpu_custom_call.1} parent=1 // pred_region
      _
    $region49: #{tpu_custom_call.1} parent=1 // pred_fallthru
      _
    // Predicated region
    $region50: #{tpu_custom_call.1} parent=1 // pred_check
      _
    $region51: #{tpu_custom_call.1} parent=1 // pred_check_branch
      %838 = sbr.rel (0) target = $region53
    $region52: #{tpu_custom_call.1} parent=1 // pred_region
      _
    $region53: #{tpu_custom_call.1} parent=1 // pred_fallthru
      _
    %839 = vsyncpa [#allocation3], 1
    %840 = vsyncpa [#allocation5], 1

</llo_original>
